<compile_context>
chip_gen: v5e
topology: v5e:2x2
jax: 0.10.0
libtpu: 0.0.40
codegen_flags: <defaults>
</compile_context>

<pallas_src>
from functools import partial

import jax
import jax.numpy as jnp
from jax.experimental import pallas as pl
from jax.experimental.pallas import tpu as pltpu

_IDX_SENTINEL = 2 ** 30  # larger than any valid support index


def _round_up(x: int, m: int) -> int:
    return ((x + m - 1) // m) * m


def _knn_kernel(q_ref, s_ref, nbr_ref, dist_ref, best_d2_ref, best_idx_ref, *,
                n_neighbors: int, np_valid: int, tile_np: int, mask_pad: bool):
    """One (batch, query-tile, support-tile) grid step."""
    j = pl.program_id(2)
    n_j = pl.num_programs(2)

    # Running top-K scratch persists across the support axis; init at tile 0.
    @pl.when(j == 0)
    def _init():
        best_d2_ref[...] = jnp.full(best_d2_ref.shape, jnp.inf,
                                    best_d2_ref.dtype)
        best_idx_ref[...] = jnp.full(best_idx_ref.shape, _IDX_SENTINEL,
                                     best_idx_ref.dtype)

    q = q_ref[0].astype(jnp.float32)   # (TN, 3)   queries, sublane-major
    s = s_ref[0].astype(jnp.float32)   # (3, TNp)  support, lane-major

    qx, qy, qz = q[:, 0:1], q[:, 1:2], q[:, 2:3]      # (TN, 1) sublane vectors
    sx, sy, sz = s[0:1, :], s[1:2, :], s[2:3, :]      # (1, TNp) lane vectors

    # d2 = |q|^2 + |s|^2 - 2 q.s, built with VPU outer-product broadcasts.
    s2 = sx * sx + sy * sy + sz * sz                  # (1, TNp)
    q2 = qx * qx + qy * qy + qz * qz                  # (TN, 1)
    cross = qx * sx + qy * sy + qz * sz               # (TN, TNp)
    d2 = (s2 - 2.0 * cross) + q2                      # (TN, TNp)

    tn, tnp = d2.shape
    col = j * tile_np + jax.lax.broadcasted_iota(jnp.int32, (tn, tnp), 1)
    if mask_pad:
        d2 = jnp.where(col < np_valid, d2, jnp.inf)   # padded support columns

    # Merge the running top-K with this tile: K extract-min passes over
    # (TN, K + TNp).  Ties broken by smallest global support index (matches
    # lax.top_k / torch.topk stability).
    comb_d2 = jnp.concatenate([best_d2_ref[...], d2], axis=-1)
    comb_ix = jnp.concatenate([best_idx_ref[...], col], axis=-1)
    d2_cols, ix_cols = [], []
    for _ in range(n_neighbors):
        m = jnp.min(comb_d2, axis=-1, keepdims=True)                # (TN, 1)
        is_m = comb_d2 <= m
        mi = jnp.min(jnp.where(is_m, comb_ix, _IDX_SENTINEL),
                     axis=-1, keepdims=True)                        # (TN, 1)
        d2_cols.append(m)
        ix_cols.append(mi)
        comb_d2 = jnp.where(comb_ix == mi, jnp.inf, comb_d2)
    new_d2 = jnp.concatenate(d2_cols, axis=-1)                      # (TN, K)
    new_ix = jnp.concatenate(ix_cols, axis=-1)                      # (TN, K)
    best_d2_ref[...] = new_d2
    best_idx_ref[...] = new_ix

    # Finalize once per (batch, query-tile): clamp, one sqrt, one block store.
    @pl.when(j == n_j - 1)
    def _finalize():
        dist_ref[0] = jnp.sqrt(jnp.maximum(new_d2, 0.0)).astype(dist_ref.dtype)
        nbr_ref[0] = new_ix.astype(nbr_ref.dtype)


def knn_pallas(xyz: jax.Array, xyz_query: jax.Array, n_neighbors: int, *,
               tile_n: int = 256, tile_np: int = 1024):
    """Pallas equivalent of KNN.forward(xyz, xyz_query, n_neighbors)."""
    B, Np, D = xyz.shape
    Bq, N, Dq = xyz_query.shape
    assert B == Bq and D == Dq == 3
    assert n_neighbors <= Np, "need at least n_neighbors support points"
    assert tile_n % 8 == 0 and tile_np % 128 == 0

    K = n_neighbors
    TN = min(tile_n, _round_up(N, 8))
    TNp = min(tile_np, _round_up(Np, 128))
    N_pad = _round_up(N, TN)
    Np_pad = _round_up(Np, TNp)

    q = xyz_query.astype(jnp.float32)                          # (B, N, 3)
    if N_pad != N:
        q = jnp.pad(q, ((0, 0), (0, N_pad - N), (0, 0)))
    # Coordinate-major support so streamed tiles are lane-dense.
    s = jnp.transpose(xyz.astype(jnp.float32), (0, 2, 1))      # (B, 3, Np)
    if Np_pad != Np:
        s = jnp.pad(s, ((0, 0), (0, 0), (0, Np_pad - Np)))

    grid = (B, N_pad // TN, Np_pad // TNp)
    kernel = partial(_knn_kernel, n_neighbors=K, np_valid=Np, tile_np=TNp,
                     mask_pad=(Np_pad != Np))

    # TODO(synk): the "approximate" (hnswlib) and "kdtree" code paths have no
    # Pallas equivalent; this implements the exact ("naive") semantics.
    neighbors, distances = pl.pallas_call(
        kernel,
        out_shape=(
            jax.ShapeDtypeStruct((B, N_pad, K), jnp.int32),
            jax.ShapeDtypeStruct((B, N_pad, K), jnp.float32),
        ),
        grid_spec=pltpu.PrefetchScalarGridSpec(
            num_scalar_prefetch=0,
            grid=grid,
            in_specs=[
                pl.BlockSpec((1, TN, 3), lambda b, i, j: (b, i, 0)),   # queries
                pl.BlockSpec((1, 3, TNp), lambda b, i, j: (b, 0, j)),  # support
            ],
            out_specs=[
                pl.BlockSpec((1, TN, K), lambda b, i, j: (b, i, 0)),
                pl.BlockSpec((1, TN, K), lambda b, i, j: (b, i, 0)),
            ],
            scratch_shapes=[
                pltpu.VMEM((TN, K), jnp.float32),   # running best squared dists
                pltpu.VMEM((TN, K), jnp.int32),     # running best support ids
            ],
        ),
        compiler_params=pltpu.CompilerParams(
            dimension_semantics=("parallel", "parallel", "arbitrary"),
            vmem_limit_bytes=32 * 1024 * 1024,
        ),
    )(q, s)

    if N_pad != N:
        neighbors = neighbors[:, :N]
        distances = distances[:, :N]
    return neighbors, distances


def _knn_reference(xyz, xyz_query, n_neighbors):
    """Pure-JAX reference (same arithmetic as the kernel, selection via top_k)."""
    q = xyz_query.astype(jnp.float32)
    s = xyz.astype(jnp.float32)
    qx, qy, qz = q[..., 0:1], q[..., 1:2], q[..., 2:3]          # (B, N, 1)
    sx = s[..., 0][:, None, :]
    sy = s[..., 1][:, None, :]
    sz = s[..., 2][:, None, :]                                  # (B, 1, Np)
    s2 = sx * sx + sy * sy + sz * sz
    q2 = qx * qx + qy * qy + qz * qz
    cross = qx * sx + qy * sy + qz * sz
    d2 = (s2 - 2.0 * cross) + q2
    neg_d2, idx = jax.lax.top_k(-d2, n_neighbors)
    return idx.astype(jnp.int32), jnp.sqrt(jnp.maximum(-neg_d2, 0.0))


if __name__ == "__main__":
    key = jax.random.PRNGKey(0)
    k1, k2, k3, k4 = jax.random.split(key, 4)

    # Case 1: small shapes, single tile along every axis.
    B, N_support, N_query, K = 2, 16, 8, 4
    xyz = jax.random.normal(k1, (B, N_support, 3), dtype=jnp.float32)
    xyz_query = jax.random.normal(k2, (B, N_query, 3), dtype=jnp.float32)

    neighbors, distances = knn_pallas(xyz, xyz_query, K)
    jax.block_until_ready((neighbors, distances))

    ref_idx, ref_dist = _knn_reference(xyz, xyz_query, K)
    assert neighbors.shape == (B, N_query, K)
    assert distances.shape == (B, N_query, K)
    assert jnp.all(neighbors == ref_idx), "case 1: neighbor indices mismatch"
    assert jnp.allclose(distances, ref_dist, atol=1e-5), "case 1: distances mismatch"

    # Case 2: exercises multiple query tiles, multiple support tiles and
    # support-axis padding (streaming top-K merge across tiles).
    B2, Np2, N2, K2 = 2, 300, 50, 8
    xyz2 = jax.random.normal(k3, (B2, Np2, 3), dtype=jnp.float32)
    xyz_query2 = jax.random.normal(k4, (B2, N2, 3), dtype=jnp.float32)

    nbr2, dist2 = knn_pallas(xyz2, xyz_query2, K2, tile_n=32, tile_np=128)
    jax.block_until_ready((nbr2, dist2))

    ref_idx2, ref_dist2 = _knn_reference(xyz2, xyz_query2, K2)
    assert nbr2.shape == (B2, N2, K2) and dist2.shape == (B2, N2, K2)
    assert jnp.all(nbr2 == ref_idx2), "case 2: neighbor indices mismatch"
    assert jnp.allclose(dist2, ref_dist2, atol=1e-5), "case 2: distances mismatch"

    print("KERNEL_OK")
</pallas_src>

<mosaic_0001>
module attributes {stable_mosaic.version = 11 : i64} {
  func.func @_knn_kernel(%arg0: i32, %arg1: i32, %arg2: i32, %arg3: memref<1x8x3xf32, #tpu.memory_space<vmem>>, %arg4: memref<1x3x128xf32, #tpu.memory_space<vmem>>, %arg5: memref<1x8x4xi32, #tpu.memory_space<vmem>>, %arg6: memref<1x8x4xf32, #tpu.memory_space<vmem>>, %arg7: memref<8x4xf32, #tpu.memory_space<vmem>>, %arg8: memref<8x4xi32, #tpu.memory_space<vmem>>) attributes {dimension_semantics = [#tpu.dimension_semantics<parallel>, #tpu.dimension_semantics<parallel>, #tpu.dimension_semantics<arbitrary>], iteration_bounds = array<i64: 2, 1, 1>, scalar_prefetch = 0 : i64, scratch_operands = 2 : i64, tpu.core_type = #tpu.core_type<tc>, window_params = [{transform_indices = @transform_0, window_bounds = array<i64: 1, 8, 3>}, {transform_indices = @transform_1, window_bounds = array<i64: 1, 3, 128>}, {transform_indices = @transform_2, window_bounds = array<i64: 1, 8, 4>}, {transform_indices = @transform_3, window_bounds = array<i64: 1, 8, 4>}]} {
    %c0_i32 = arith.constant 0 : i32
    %0 = arith.cmpi eq, %arg2, %c0_i32 : i32
    %1 = arith.extui %0 : i1 to i32
    %c0_i32_0 = arith.constant 0 : i32
    %2 = arith.cmpi ne, %1, %c0_i32_0 : i32
    scf.if %2 {
      %cst_31 = arith.constant 0x7F800000 : f32
      %103 = vector.broadcast %cst_31 : f32 to vector<8x4xf32>
      %c0_32 = arith.constant 0 : index
      %c0_33 = arith.constant 0 : index
      %104 = vector.load %arg7[%c0_32, %c0_33] : memref<8x4xf32, #tpu.memory_space<vmem>>, vector<8x4xf32>
      tpu.vector_store %arg7[%c0_32, %c0_33], %103 {strides = array<i32>} : memref<8x4xf32, #tpu.memory_space<vmem>>, vector<8x4xf32>,
      %c1073741824_i32_34 = arith.constant 1073741824 : i32
      %105 = vector.broadcast %c1073741824_i32_34 : i32 to vector<8x4xi32>
      %c0_35 = arith.constant 0 : index
      %c0_36 = arith.constant 0 : index
      %106 = vector.load %arg8[%c0_35, %c0_36] : memref<8x4xi32, #tpu.memory_space<vmem>>, vector<8x4xi32>
      tpu.vector_store %arg8[%c0_35, %c0_36], %105 {strides = array<i32>} : memref<8x4xi32, #tpu.memory_space<vmem>>, vector<8x4xi32>,
    } else {
    }
    %c0 = arith.constant 0 : index
    %c0_1 = arith.constant 0 : index
    %c0_2 = arith.constant 0 : index
    %3 = vector.load %arg3[%c0, %c0_1, %c0_2] : memref<1x8x3xf32, #tpu.memory_space<vmem>>, vector<1x8x3xf32>
    %4 = vector.shape_cast %3 : vector<1x8x3xf32> to vector<8x3xf32>
    %c0_3 = arith.constant 0 : index
    %c0_4 = arith.constant 0 : index
    %c0_5 = arith.constant 0 : index
    %5 = vector.load %arg4[%c0_3, %c0_4, %c0_5] : memref<1x3x128xf32, #tpu.memory_space<vmem>>, vector<1x3x128xf32>
    %6 = vector.shape_cast %5 : vector<1x3x128xf32> to vector<3x128xf32>
    %7 = vector.extract_strided_slice %4 {offsets = [0, 0], sizes = [8, 1], strides = [1, 1]} : vector<8x3xf32> to vector<8x1xf32>
    %8 = vector.extract_strided_slice %4 {offsets = [0, 1], sizes = [8, 1], strides = [1, 1]} : vector<8x3xf32> to vector<8x1xf32>
    %9 = vector.extract_strided_slice %4 {offsets = [0, 2], sizes = [8, 1], strides = [1, 1]} : vector<8x3xf32> to vector<8x1xf32>
    %10 = vector.extract_strided_slice %6 {offsets = [0, 0], sizes = [1, 128], strides = [1, 1]} : vector<3x128xf32> to vector<1x128xf32>
    %11 = vector.extract_strided_slice %6 {offsets = [1, 0], sizes = [1, 128], strides = [1, 1]} : vector<3x128xf32> to vector<1x128xf32>
    %12 = vector.extract_strided_slice %6 {offsets = [2, 0], sizes = [1, 128], strides = [1, 1]} : vector<3x128xf32> to vector<1x128xf32>
    %13 = arith.mulf %10, %10 : vector<1x128xf32>
    %14 = arith.mulf %11, %11 : vector<1x128xf32>
    %15 = arith.addf %13, %14 : vector<1x128xf32>
    %16 = arith.mulf %12, %12 : vector<1x128xf32>
    %17 = arith.addf %15, %16 : vector<1x128xf32>
    %18 = arith.mulf %7, %7 : vector<8x1xf32>
    %19 = arith.mulf %8, %8 : vector<8x1xf32>
    %20 = arith.addf %18, %19 : vector<8x1xf32>
    %21 = arith.mulf %9, %9 : vector<8x1xf32>
    %22 = arith.addf %20, %21 : vector<8x1xf32>
    %23 = vector.broadcast %7 : vector<8x1xf32> to vector<8x128xf32>
    %24 = vector.broadcast %10 : vector<1x128xf32> to vector<8x128xf32>
    %25 = arith.mulf %23, %24 : vector<8x128xf32>
    %26 = vector.broadcast %8 : vector<8x1xf32> to vector<8x128xf32>
    %27 = vector.broadcast %11 : vector<1x128xf32> to vector<8x128xf32>
    %28 = arith.mulf %26, %27 : vector<8x128xf32>
    %29 = arith.addf %25, %28 : vector<8x128xf32>
    %30 = vector.broadcast %9 : vector<8x1xf32> to vector<8x128xf32>
    %31 = vector.broadcast %12 : vector<1x128xf32> to vector<8x128xf32>
    %32 = arith.mulf %30, %31 : vector<8x128xf32>
    %33 = arith.addf %29, %32 : vector<8x128xf32>
    %cst = arith.constant 2.000000e+00 : f32
    %34 = vector.broadcast %cst : f32 to vector<8x128xf32>
    %35 = arith.mulf %34, %33 : vector<8x128xf32>
    %36 = vector.broadcast %17 : vector<1x128xf32> to vector<8x128xf32>
    %37 = arith.subf %36, %35 : vector<8x128xf32>
    %38 = vector.broadcast %22 : vector<8x1xf32> to vector<8x128xf32>
    %39 = arith.addf %37, %38 : vector<8x128xf32>
    %c128_i32 = arith.constant 128 : i32
    %40 = arith.muli %arg2, %c128_i32 : i32
    %41 = tpu.iota {dimensions = array<i32: 1>} : vector<8x128xi32>
    %42 = vector.broadcast %40 : i32 to vector<8x128xi32>
    %43 = arith.addi %42, %41 : vector<8x128xi32>
    %c16_i32 = arith.constant 16 : i32
    %44 = vector.broadcast %c16_i32 : i32 to vector<8x128xi32>
    %45 = arith.cmpi slt, %43, %44 : vector<8x128xi32>
    %cst_6 = arith.constant 0x7F800000 : f32
    %46 = vector.broadcast %cst_6 : f32 to vector<8x128xf32>
    %47 = arith.select %45, %39, %46 : vector<8x128xi1>, vector<8x128xf32>
    %c0_7 = arith.constant 0 : index
    %c0_8 = arith.constant 0 : index
    %48 = vector.load %arg7[%c0_7, %c0_8] : memref<8x4xf32, #tpu.memory_space<vmem>>, vector<8x4xf32>
    %49 = tpu.concatenate %48, %47 in 1 : vector<8x4xf32>, vector<8x128xf32> -> vector<8x132xf32>
    %c0_9 = arith.constant 0 : index
    %c0_10 = arith.constant 0 : index
    %50 = vector.load %arg8[%c0_9, %c0_10] : memref<8x4xi32, #tpu.memory_space<vmem>>, vector<8x4xi32>
    %51 = tpu.concatenate %50, %43 in 1 : vector<8x4xi32>, vector<8x128xi32> -> vector<8x132xi32>
    %cst_11 = arith.constant dense<0x7F800000> : vector<8xf32>
    %52 = vector.multi_reduction <minimumf>, %49, %cst_11 [1] : vector<8x132xf32> to vector<8xf32>
    %53 = vector.shape_cast %52 : vector<8xf32> to vector<8x1xf32>
    %54 = vector.broadcast %53 : vector<8x1xf32> to vector<8x132xf32>
    %55 = arith.cmpf ole, %49, %54 : vector<8x132xf32>
    %c1073741824_i32 = arith.constant 1073741824 : i32
    %56 = vector.broadcast %c1073741824_i32 : i32 to vector<8x132xi32>
    %57 = arith.select %55, %51, %56 : vector<8x132xi1>, vector<8x132xi32>
    %cst_12 = arith.constant dense<2147483647> : vector<8xi32>
    %58 = vector.multi_reduction <minsi>, %57, %cst_12 [1] : vector<8x132xi32> to vector<8xi32>
    %59 = vector.shape_cast %58 : vector<8xi32> to vector<8x1xi32>
    %60 = vector.broadcast %59 : vector<8x1xi32> to vector<8x132xi32>
    %61 = arith.cmpi eq, %51, %60 : vector<8x132xi32>
    %cst_13 = arith.constant 0x7F800000 : f32
    %62 = vector.broadcast %cst_13 : f32 to vector<8x132xf32>
    %63 = arith.select %61, %62, %49 : vector<8x132xi1>, vector<8x132xf32>
    %cst_14 = arith.constant dense<0x7F800000> : vector<8xf32>
    %64 = vector.multi_reduction <minimumf>, %63, %cst_14 [1] : vector<8x132xf32> to vector<8xf32>
    %65 = vector.shape_cast %64 : vector<8xf32> to vector<8x1xf32>
    %66 = vector.broadcast %65 : vector<8x1xf32> to vector<8x132xf32>
    %67 = arith.cmpf ole, %63, %66 : vector<8x132xf32>
    %c1073741824_i32_15 = arith.constant 1073741824 : i32
    %68 = vector.broadcast %c1073741824_i32_15 : i32 to vector<8x132xi32>
    %69 = arith.select %67, %51, %68 : vector<8x132xi1>, vector<8x132xi32>
    %cst_16 = arith.constant dense<2147483647> : vector<8xi32>
    %70 = vector.multi_reduction <minsi>, %69, %cst_16 [1] : vector<8x132xi32> to vector<8xi32>
    %71 = vector.shape_cast %70 : vector<8xi32> to vector<8x1xi32>
    %72 = vector.broadcast %71 : vector<8x1xi32> to vector<8x132xi32>
    %73 = arith.cmpi eq, %51, %72 : vector<8x132xi32>
    %cst_17 = arith.constant 0x7F800000 : f32
    %74 = vector.broadcast %cst_17 : f32 to vector<8x132xf32>
    %75 = arith.select %73, %74, %63 : vector<8x132xi1>, vector<8x132xf32>
    %cst_18 = arith.constant dense<0x7F800000> : vector<8xf32>
    %76 = vector.multi_reduction <minimumf>, %75, %cst_18 [1] : vector<8x132xf32> to vector<8xf32>
    %77 = vector.shape_cast %76 : vector<8xf32> to vector<8x1xf32>
    %78 = vector.broadcast %77 : vector<8x1xf32> to vector<8x132xf32>
    %79 = arith.cmpf ole, %75, %78 : vector<8x132xf32>
    %c1073741824_i32_19 = arith.constant 1073741824 : i32
    %80 = vector.broadcast %c1073741824_i32_19 : i32 to vector<8x132xi32>
    %81 = arith.select %79, %51, %80 : vector<8x132xi1>, vector<8x132xi32>
    %cst_20 = arith.constant dense<2147483647> : vector<8xi32>
    %82 = vector.multi_reduction <minsi>, %81, %cst_20 [1] : vector<8x132xi32> to vector<8xi32>
    %83 = vector.shape_cast %82 : vector<8xi32> to vector<8x1xi32>
    %84 = vector.broadcast %83 : vector<8x1xi32> to vector<8x132xi32>
    %85 = arith.cmpi eq, %51, %84 : vector<8x132xi32>
    %cst_21 = arith.constant 0x7F800000 : f32
    %86 = vector.broadcast %cst_21 : f32 to vector<8x132xf32>
    %87 = arith.select %85, %86, %75 : vector<8x132xi1>, vector<8x132xf32>
    %cst_22 = arith.constant dense<0x7F800000> : vector<8xf32>
    %88 = vector.multi_reduction <minimumf>, %87, %cst_22 [1] : vector<8x132xf32> to vector<8xf32>
    %89 = vector.shape_cast %88 : vector<8xf32> to vector<8x1xf32>
    %90 = vector.broadcast %89 : vector<8x1xf32> to vector<8x132xf32>
    %91 = arith.cmpf ole, %87, %90 : vector<8x132xf32>
    %c1073741824_i32_23 = arith.constant 1073741824 : i32
    %92 = vector.broadcast %c1073741824_i32_23 : i32 to vector<8x132xi32>
    %93 = arith.select %91, %51, %92 : vector<8x132xi1>, vector<8x132xi32>
    %cst_24 = arith.constant dense<2147483647> : vector<8xi32>
    %94 = vector.multi_reduction <minsi>, %93, %cst_24 [1] : vector<8x132xi32> to vector<8xi32>
    %95 = vector.shape_cast %94 : vector<8xi32> to vector<8x1xi32>
    %96 = tpu.concatenate %53, %65, %77, %89 in 1 : vector<8x1xf32>, vector<8x1xf32>, vector<8x1xf32>, vector<8x1xf32> -> vector<8x4xf32>
    %97 = tpu.concatenate %59, %71, %83, %95 in 1 : vector<8x1xi32>, vector<8x1xi32>, vector<8x1xi32>, vector<8x1xi32> -> vector<8x4xi32>
    %c0_25 = arith.constant 0 : index
    %c0_26 = arith.constant 0 : index
    %98 = vector.load %arg7[%c0_25, %c0_26] : memref<8x4xf32, #tpu.memory_space<vmem>>, vector<8x4xf32>
    tpu.vector_store %arg7[%c0_25, %c0_26], %96 {strides = array<i32>} : memref<8x4xf32, #tpu.memory_space<vmem>>, vector<8x4xf32>,
    %c0_27 = arith.constant 0 : index
    %c0_28 = arith.constant 0 : index
    %99 = vector.load %arg8[%c0_27, %c0_28] : memref<8x4xi32, #tpu.memory_space<vmem>>, vector<8x4xi32>
    tpu.vector_store %arg8[%c0_27, %c0_28], %97 {strides = array<i32>} : memref<8x4xi32, #tpu.memory_space<vmem>>, vector<8x4xi32>,
    %c0_i32_29 = arith.constant 0 : i32
    %100 = arith.cmpi eq, %arg2, %c0_i32_29 : i32
    %101 = arith.extui %100 : i1 to i32
    %c0_i32_30 = arith.constant 0 : i32
    %102 = arith.cmpi ne, %101, %c0_i32_30 : i32
    scf.if %102 {
      %cst_31 = arith.constant 0.000000e+00 : f32
      %103 = vector.broadcast %cst_31 : f32 to vector<8x4xf32>
      %104 = arith.maximumf %96, %103 : vector<8x4xf32>
      %105 = math.sqrt %104 : vector<8x4xf32>
      %c0_32 = arith.constant 0 : index
      %c0_33 = arith.constant 0 : index
      %c0_34 = arith.constant 0 : index
      %106 = vector.load %arg6[%c0_32, %c0_33, %c0_34] : memref<1x8x4xf32, #tpu.memory_space<vmem>>, vector<1x8x4xf32>
      %107 = vector.shape_cast %106 : vector<1x8x4xf32> to vector<8x4xf32>
      %108 = vector.shape_cast %105 : vector<8x4xf32> to vector<1x8x4xf32>
      tpu.vector_store %arg6[%c0_32, %c0_33, %c0_34], %108 {strides = array<i32>} : memref<1x8x4xf32, #tpu.memory_space<vmem>>, vector<1x8x4xf32>,
      %c0_35 = arith.constant 0 : index
      %c0_36 = arith.constant 0 : index
      %c0_37 = arith.constant 0 : index
      %109 = vector.load %arg5[%c0_35, %c0_36, %c0_37] : memref<1x8x4xi32, #tpu.memory_space<vmem>>, vector<1x8x4xi32>
      %110 = vector.shape_cast %109 : vector<1x8x4xi32> to vector<8x4xi32>
      %111 = vector.shape_cast %97 : vector<8x4xi32> to vector<1x8x4xi32>
      tpu.vector_store %arg5[%c0_35, %c0_36, %c0_37], %111 {strides = array<i32>} : memref<1x8x4xi32, #tpu.memory_space<vmem>>, vector<1x8x4xi32>,
    } else {
    }
    return
  }
  func.func @transform_0(%arg0: i32, %arg1: i32, %arg2: i32) -> (i32, i32, i32) {
    %c0_i32 = arith.constant 0 : i32
    %c0_i32_0 = arith.constant 0 : i32
    return %arg0, %arg1, %c0_i32 : i32, i32, i32
  }
  func.func @transform_1(%arg0: i32, %arg1: i32, %arg2: i32) -> (i32, i32, i32) {
    %c0_i32 = arith.constant 0 : i32
    %c0_i32_0 = arith.constant 0 : i32
    return %arg0, %c0_i32, %arg2 : i32, i32, i32
  }
  func.func @transform_2(%arg0: i32, %arg1: i32, %arg2: i32) -> (i32, i32, i32) {
    %c0_i32 = arith.constant 0 : i32
    %c0_i32_0 = arith.constant 0 : i32
    return %arg0, %arg1, %c0_i32 : i32, i32, i32
  }
  func.func @transform_3(%arg0: i32, %arg1: i32, %arg2: i32) -> (i32, i32, i32) {
    %c0_i32 = arith.constant 0 : i32
    %c0_i32_0 = arith.constant 0 : i32
    return %arg0, %arg1, %c0_i32 : i32, i32, i32
  }
}

</mosaic_0001>

<llo_original>
// kernel: tpu_custom_call.1
$region0: #{tpu_custom_call.1}
  #allocation0 [shape = 'u32[]', space=smem, size = 0x4, offset = 0x4, fixed_abs, tag = 'smem constant byte address 0x4 - core index']
  #allocation1 [shape = 'u32[72,128]{1,0:T(1,128)}', space=vmem, size = 0x9000, scoped, tag = 'internal scratch']
  #allocation2 [shape = 'f32[8,4]{1,0:T(8,128)}', space=vmem, size = 0x1000, scoped, tag = 'scratch operand']
  #allocation3 [shape = 's32[8,4]{1,0:T(8,128)}', space=vmem, size = 0x1000, scoped, tag = 'scratch operand']
  %s0 = inlined_call_operand.vmem [shape: f32[2,8,3], index: 0, kind: input, shape index: {}]
  %s1 = inlined_call_operand.vmem [shape: f32[2,3,128], index: 1, kind: input, shape index: {}]
  %s2 = inlined_call_operand.vmem [shape: s32[2,8,4], index: 2, kind: output, shape index: {0}]
  %s3 = inlined_call_operand.vmem [shape: f32[2,8,4], index: 3, kind: output, shape index: {1}]
  %4 = xla_tuple %s2, %s3
  %s5 = sld [smem:[#allocation0]]
  $region57: #{tpu_custom_call.1} parent=0
    _
  %s7 = ssub.s32 1, %s5
  %s8 = scalar_select 0, %s7, %s5
  loop: start=0, step=1, limit=4
  $region2: #{tpu_custom_call.1} parent=0 // loop_pre_header
    _
  $region3: #{tpu_custom_call.1} parent=0 // loop_header
    %s10 = sphi 0, %s14
    %p11 = scmp.ge.s32.totalorder %s10, 4
    %s17 = sphi 0, %s36
    %s18 = sphi 0, %s32
    %s19 = sphi 0, %s28
    %s20 = sphi 0, %s17
    %s21 = sphi 0, %s18
    %s22 = sphi 0, %s19
    %s23 = sphi 0, %s20
    %s24 = sphi 0, %s21
    %s25 = sphi 0, %s22
    %s41 = sphi 0, %s43
    %s44 = sphi 0, %s41
    %s45 = sphi 0, %s44
    %s61 = sphi 0, %s45
    %s69 = sphi 0, %s71
    %s72 = sphi 0, %s69
    %s73 = sphi 0, %s72
    %s89 = sphi 0, %s73
    %s97 = sphi 0, %s99
    %s100 = sphi 0, %s97
    %s101 = sphi 0, %s100
    %s117 = sphi 0, %s101
    %s125 = sphi 0, %s127
    %s128 = sphi 0, %s125
    %s129 = sphi 0, %s128
    %s145 = sphi 0, %s129
  $region4: #{tpu_custom_call.1} parent=0 // loop_header_branch
    %13 = sbr.rel (%p11) target = $region8
  $region5: #{tpu_custom_call.1} parent=0 // loop_body
    %s15 = ssub.s32 %s10, 1
    %s16 = ssub.s32 %s10, 2
    %s26 = sadd.s32 1, %s19
    %p27 = scmp.ge.s32.totalorder %s26, 1
    %s28 = scalar_select %p27, 0, %s26
    %s29 = sadd.s32 1, %s18
    %s30 = scalar_select %p27, %s29, %s18
    %p31 = scmp.ge.s32.totalorder %s30, 1
    %s32 = scalar_select %p31, 0, %s30
    %s33 = sadd.s32 1, %s17
    %s34 = scalar_select %p31, %s33, %s17
    %p35 = scmp.ge.s32.totalorder %s34, 2
    %s36 = scalar_select %p35, 0, %s34
    %s37 = ssub.s32 %s17, %s36
    %s38 = ssub.s32 %s18, %s32
    %s39 = sor.u32 %s37, %s38
    %p40 = scmp.eq.s32.totalorder %s39, 0
    %s42 = sadd.s32 %s41, 1
    %s43 = scalar_select %p40, %s41, %s42
    %p46 = pneg %p40
    %p47 = scmp.eq.s32.totalorder %s10, 1
    %p48 = por %p46, %p47
    %p49 = scmp.ne.s32.totalorder %s41, %s44
    %p50 = scmp.eq.s32.totalorder %s10, 0
    %p51 = por %p49, %p50
    %p52 = scmp.ne.s32.totalorder %s41, %s44
    %p53 = scmp.eq.s32.totalorder %s15, 1
    %p54 = por %p52, %p53
    %p55 = scmp.ne.s32.totalorder %s44, %s45
    %p56 = scmp.eq.s32.totalorder %s15, 0
    %p57 = por %p55, %p56
    %p58 = scmp.ne.s32.totalorder %s44, %s45
    %p59 = scmp.eq.s32.totalorder %s16, 1
    %p60 = por %p58, %p59
    %p62 = scmp.ne.s32.totalorder %s45, %s61
    %p63 = scmp.eq.s32.totalorder %s16, 0
    %p64 = por %p62, %p63
    %s65 = ssub.s32 %s17, %s36
    %s66 = ssub.s32 %s19, %s28
    %s67 = sor.u32 %s65, %s66
    %p68 = scmp.eq.s32.totalorder %s67, 0
    %s70 = sadd.s32 %s69, 1
    %s71 = scalar_select %p68, %s69, %s70
    %p74 = pneg %p68
    %p75 = scmp.eq.s32.totalorder %s10, 1
    %p76 = por %p74, %p75
    %p77 = scmp.ne.s32.totalorder %s69, %s72
    %p78 = scmp.eq.s32.totalorder %s10, 0
    %p79 = por %p77, %p78
    %p80 = scmp.ne.s32.totalorder %s69, %s72
    %p81 = scmp.eq.s32.totalorder %s15, 1
    %p82 = por %p80, %p81
    %p83 = scmp.ne.s32.totalorder %s72, %s73
    %p84 = scmp.eq.s32.totalorder %s15, 0
    %p85 = por %p83, %p84
    %p86 = scmp.ne.s32.totalorder %s72, %s73
    %p87 = scmp.eq.s32.totalorder %s16, 1
    %p88 = por %p86, %p87
    %p90 = scmp.ne.s32.totalorder %s73, %s89
    %p91 = scmp.eq.s32.totalorder %s16, 0
    %p92 = por %p90, %p91
    %s93 = ssub.s32 %s17, %s36
    %s94 = ssub.s32 %s18, %s32
    %s95 = sor.u32 %s93, %s94
    %p96 = scmp.eq.s32.totalorder %s95, 0
    %s98 = sadd.s32 %s97, 1
    %s99 = scalar_select %p96, %s97, %s98
    %p102 = pneg %p96
    %p103 = scmp.eq.s32.totalorder %s10, 1
    %p104 = por %p102, %p103
    %p105 = scmp.ne.s32.totalorder %s97, %s100
    %p106 = scmp.eq.s32.totalorder %s10, 0
    %p107 = por %p105, %p106
    %p108 = scmp.ne.s32.totalorder %s97, %s100
    %p109 = scmp.eq.s32.totalorder %s15, 1
    %p110 = por %p108, %p109
    %p111 = scmp.ne.s32.totalorder %s100, %s101
    %p112 = scmp.eq.s32.totalorder %s15, 0
    %p113 = por %p111, %p112
    %p114 = scmp.ne.s32.totalorder %s100, %s101
    %p115 = scmp.eq.s32.totalorder %s16, 1
    %p116 = por %p114, %p115
    %p118 = scmp.ne.s32.totalorder %s101, %s117
    %p119 = scmp.eq.s32.totalorder %s16, 0
    %p120 = por %p118, %p119
    %s121 = ssub.s32 %s17, %s36
    %s122 = ssub.s32 %s18, %s32
    %s123 = sor.u32 %s121, %s122
    %p124 = scmp.eq.s32.totalorder %s123, 0
    %s126 = sadd.s32 %s125, 1
    %s127 = scalar_select %p124, %s125, %s126
    %p130 = pneg %p124
    %p131 = scmp.eq.s32.totalorder %s10, 1
    %p132 = por %p130, %p131
    %p133 = scmp.ne.s32.totalorder %s125, %s128
    %p134 = scmp.eq.s32.totalorder %s10, 0
    %p135 = por %p133, %p134
    %p136 = scmp.ne.s32.totalorder %s125, %s128
    %p137 = scmp.eq.s32.totalorder %s15, 1
    %p138 = por %p136, %p137
    %p139 = scmp.ne.s32.totalorder %s128, %s129
    %p140 = scmp.eq.s32.totalorder %s15, 0
    %p141 = por %p139, %p140
    %p142 = scmp.ne.s32.totalorder %s128, %s129
    %p143 = scmp.eq.s32.totalorder %s16, 1
    %p144 = por %p142, %p143
    %p146 = scmp.ne.s32.totalorder %s129, %s145
    %p147 = scmp.eq.s32.totalorder %s16, 0
    %p148 = por %p146, %p147
    %p149 = scmp.le.s32.totalorder 1, %s10
    %p150 = scmp.lt.s32.totalorder %s10, 3
    %p151 = pnand %p149, %p150
    %p152 = pneg %p151
    // Predicated region
    $region9: #{tpu_custom_call.1} parent=5 // pred_check
      _
    $region10: #{tpu_custom_call.1} parent=5 // pred_check_branch
      %154 = sbr.rel (%p151) target = $region12
    $region11: #{tpu_custom_call.1} parent=5 // pred_region
      %s155 = ssub.s32 %s10, 1
    $region12: #{tpu_custom_call.1} parent=5 // pred_fallthru
      _
    %p156 = scmp.lt.s32.totalorder %s10, 2
    // Predicated region
    $region13: #{tpu_custom_call.1} parent=5 // pred_check
      %p157 = pneg %p156
    $region14: #{tpu_custom_call.1} parent=5 // pred_check_branch
      %159 = sbr.rel (%p157) target = $region16
    $region15: #{tpu_custom_call.1} parent=5 // pred_region
      // Predicated region
      $region17: #{tpu_custom_call.1} parent=15 // pred_check
        %p160 = pneg %p51
      $region18: #{tpu_custom_call.1} parent=15 // pred_check_branch
        %162 = sbr.rel (%p160) target = $region20
      $region19: #{tpu_custom_call.1} parent=15 // pred_region
        %p163 = scmp.lt.s32.totalorder %s17, 1
        %s164 = scalar_select %p163, %s17, 1
        %p165 = scmp.lt.s32.totalorder %s18, 0
        %s166 = scalar_select %p165, %s18, 0
        %s167 = sadd.s32 %s166, %s164
        %s168 = smul.addr %s167, 8
        %s169 = scalar_lea.vmem %s0, %s168
      $region20: #{tpu_custom_call.1} parent=15 // pred_fallthru
        _
      // Predicated region
      $region21: #{tpu_custom_call.1} parent=15 // pred_check
        %p170 = pneg %p79
      $region22: #{tpu_custom_call.1} parent=15 // pred_check_branch
        %172 = sbr.rel (%p170) target = $region24
      $region23: #{tpu_custom_call.1} parent=15 // pred_region
        %p173 = scmp.lt.s32.totalorder %s17, 1
        %s174 = scalar_select %p173, %s17, 1
        %p175 = scmp.lt.s32.totalorder %s19, 0
        %s176 = scalar_select %p175, %s19, 0
        %s177 = sadd.s32 %s176, %s174
        %s178 = smul.addr %s177, 4
        %s179 = scalar_lea.vmem %s1, %s178
      $region24: #{tpu_custom_call.1} parent=15 // pred_fallthru
        _
    $region16: #{tpu_custom_call.1} parent=5 // pred_fallthru
      _
    %p180 = scmp.le.s32.totalorder 1, %s10
    %p181 = scmp.lt.s32.totalorder %s10, 3
    %p182 = pnand %p180, %p181
    %p183 = pneg %p182
    // Predicated region
    $region25: #{tpu_custom_call.1} parent=5 // pred_check
      _
    $region26: #{tpu_custom_call.1} parent=5 // pred_check_branch
      %185 = sbr.rel (%p182) target = $region28
    $region27: #{tpu_custom_call.1} parent=5 // pred_region
      %s186 = ssub.s32 %s10, 1
      %p187 = scmp.lt.s32.totalorder %s20, 1
      %s188 = scalar_select %p187, %s20, 1
      %p189 = scmp.lt.s32.totalorder %s21, 0
      %s190 = scalar_select %p189, %s21, 0
      %s191 = sadd.s32 %s190, %s188
      %s192 = smul.addr %s191, 8
      %s193 = scalar_lea.vmem %s0, %s192
      %p194 = pneg %p57
      %p195 = pneg %p54
      %p196 = scmp.lt.s32.totalorder %s20, 1
      %s197 = scalar_select %p196, %s20, 1
      %p198 = scmp.lt.s32.totalorder %s22, 0
      %s199 = scalar_select %p198, %s22, 0
      %s200 = sadd.s32 %s199, %s197
      %s201 = smul.addr %s200, 4
      %s202 = scalar_lea.vmem %s1, %s201
      %p203 = pneg %p85
      %p204 = pneg %p82
      %p205 = pneg %p113
      %p206 = pneg %p110
      %p207 = scmp.lt.s32.totalorder %s20, 1
      %s208 = scalar_select %p207, %s20, 1
      %p209 = scmp.lt.s32.totalorder %s21, 0
      %s210 = scalar_select %p209, %s21, 0
      %s211 = sadd.s32 %s210, %s208
      %s212 = smul.addr %s211, 8
      %s213 = scalar_lea.vmem %s2, %s212
      %p214 = pneg %p141
      %p215 = pneg %p138
      %p216 = scmp.lt.s32.totalorder %s20, 1
      %s217 = scalar_select %p216, %s20, 1
      %p218 = scmp.lt.s32.totalorder %s21, 0
      %s219 = scalar_select %p218, %s21, 0
      %s220 = sadd.s32 %s219, %s217
      %s221 = smul.addr %s220, 8
      %s222 = scalar_lea.vmem %s3, %s221
      %p223 = scmp.lt.s32.totalorder %s20, 1
      %s224 = scalar_select %p223, %s20, 1
      %p225 = scmp.lt.s32.totalorder %s21, 0
      %s226 = scalar_select %p225, %s21, 0
      %s227 = sadd.s32 %s226, %s224
      %s228 = smul.addr %s227, 8
      %s229 = scalar_lea.vmem %s0, %s228
      %p230 = scmp.lt.s32.totalorder %s20, 1
      %s231 = scalar_select %p230, %s20, 1
      %p232 = scmp.lt.s32.totalorder %s22, 0
      %s233 = scalar_select %p232, %s22, 0
      %s234 = sadd.s32 %s233, %s231
      %s235 = smul.addr %s234, 4
      %s236 = scalar_lea.vmem %s1, %s235
      %p237 = scmp.lt.s32.totalorder %s20, 1
      %s238 = scalar_select %p237, %s20, 1
      %p239 = scmp.lt.s32.totalorder %s21, 0
      %s240 = scalar_select %p239, %s21, 0
      %s241 = sadd.s32 %s240, %s238
      %s242 = smul.addr %s241, 8
      %s243 = scalar_lea.vmem %s2, %s242
      %p244 = scmp.lt.s32.totalorder %s20, 1
      %s245 = scalar_select %p244, %s20, 1
      %p246 = scmp.lt.s32.totalorder %s21, 0
      %s247 = scalar_select %p246, %s21, 0
      %s248 = sadd.s32 %s247, %s245
      %s249 = smul.addr %s248, 8
      %s250 = scalar_lea.vmem %s3, %s249
      %p251 = scmp.eq.s32.totalorder %s22, 0
      // Predicated region
      $region29: #{tpu_custom_call.1} parent=27 // pred_check
        %p252 = pneg %p251
      $region30: #{tpu_custom_call.1} parent=27 // pred_check_branch
        %254 = sbr.rel (%p252) target = $region32
      $region31: #{tpu_custom_call.1} parent=27 // pred_region
        %vm255 = vcmask 31744
        %256 = vst.msk [vmem:[#allocation2] sm:$0xff] %vm255, inf
        %257 = vst.msk [vmem:[#allocation3] sm:$0xff] %vm255, 1073741824
      $region32: #{tpu_custom_call.1} parent=27 // pred_fallthru
        _
      %v258 = vld [vmem:[%s229] sm:$0xff]
      %v259 = vld [vmem:[%s236] sm:$0x7]
      %v260 = vmul.f32 %v259, %v259
      %v262 = vrot.slane %v260, 1
      %v264 = vadd.f32 %v260, %v262
      %v265 = vrot.slane %v260, 2
      %v267 = vadd.f32 %v264, %v265
      %v268 = vmul.f32 %v258, %v258
      %270 = vrot.lane.b32.xlu0 %v268, 127
      %v271 = vpop.permute.xlu0 %270
      %v273 = vadd.f32 %v268, %v271
      %274 = vrot.lane.b32.xlu0 %v268, 126
      %v275 = vpop.permute.xlu0 %274
      %v277 = vadd.f32 %v273, %v275
      %279 = vset.pattern.permute.xlu0 0
      %280 = vperm.xlu0 %279, %v258
      %v281 = vpop.permute.xlu0 %280
      %v283 = vperm.slane %v259, 0
      %v284 = vmul.f32 %v281, %v283
      %285 = vset.pattern.permute.xlu0 1
      %286 = vperm.xlu0 %285, %v258
      %v287 = vpop.permute.xlu0 %286
      %v289 = vperm.slane %v259, 1
      %v290 = vmul.f32 %v287, %v289
      %v291 = vadd.f32 %v284, %v290
      %292 = vset.pattern.permute.xlu0 2
      %293 = vperm.xlu0 %292, %v258
      %v294 = vpop.permute.xlu0 %293
      %v296 = vperm.slane %v259, 2
      %v297 = vmul.f32 %v294, %v296
      %v298 = vadd.f32 %v291, %v297
      %v299 = vmul.f32 %v298, 2.0
      %v300 = vperm.slane %v267, 0
      %v301 = vsub.f32 %v300, %v299
      %303 = vset.pattern.permute.xlu0 0
      %304 = vperm.xlu0 %303, %v277
      %v305 = vpop.permute.xlu0 %304
      %v307 = vadd.f32 %v301, %v305
      %s308 = smul.u32 %s22, 128
      %v309 = vlaneseq
      %v310 = vand.u32 %v309, 127
      %v311 = vstv %s308
      %v312 = vadd.s32 %v311, %v310
      %vm313 = vcmp.lt.s32.totalorder %v312, 16
      %v314 = vsel %vm313, %v307, inf
      %v315 = vld [vmem:[#allocation2] sm:$0xff]
      %317 = vrot.lane.b32.xlu0 %v314, 4
      %v318 = vpop.permute.xlu0 %317
      %vm320 = vcmask 31744
      %v321 = vsel %vm320, %v315, %v318
      %v322 = vld [vmem:[#allocation3] sm:$0xff]
      %323 = vrot.lane.b32.xlu0 %v312, 4
      %v324 = vpop.permute.xlu0 %323
      %v325 = vsel %vm320, %v322, %v324
      %v326 = vsel %vm320, %v318, inf
      %v327 = vmin.f32 %v321, %v326
      %328 = vmin.xlane.f32.xlu0 %v327
      %v329 = vpop.xlane.xlu0 %328
      %vm330 = vcmp.le.f32.partialorder %v321, %v329
      %vm331 = vcmp.le.f32.partialorder %v318, %v329
      %v332 = vsel %vm330, %v325, 1073741824
      %v333 = vsel %vm331, %v324, 1073741824
      %v334 = vsel %vm320, %v333, 2147483647
      %vm335 = vcmp.lt.s32.totalorder %v332, %v334
      %v336 = vsel %vm335, %v332, %v334
      %v337 = vand.u32 %v336, 65535
      %v338 = vshra.s32 %v336, 16
      %v339 = vcvt.s32.f32 %v337
      %v340 = vcvt.s32.f32 %v338
      %341 = vmin.xlane.f32.xlu0 %v340
      %v342 = vpop.xlane.xlu0 %341
      %vm343 = vcmp.eq.f32.partialorder %v340, %v342
      %v344 = vsel %vm343, %v339, inf
      %345 = vmin.xlane.f32.xlu0 %v344
      %v346 = vpop.xlane.xlu0 %345
      %v347 = vcvt.f32.s32 %v346
      %v348 = vcvt.f32.s32 %v342
      %v349 = vshll.u32 %v348, 16
      %v350 = vadd.s32 %v349, %v347
      %vm351 = vcmp.eq.s32.totalorder %v325, %v350
      %vm352 = vcmp.eq.s32.totalorder %v324, %v350
      %v353 = vsel %vm351, inf, %v321
      %v354 = vsel %vm352, inf, %v318
      %v355 = vsel %vm320, %v354, inf
      %v356 = vmin.f32 %v353, %v355
      %357 = vmin.xlane.f32.xlu0 %v356
      %v358 = vpop.xlane.xlu0 %357
      %vm359 = vcmp.le.f32.partialorder %v353, %v358
      %vm360 = vcmp.le.f32.partialorder %v354, %v358
      %v361 = vsel %vm359, %v325, 1073741824
      %v362 = vsel %vm360, %v324, 1073741824
      %v363 = vsel %vm320, %v362, 2147483647
      %vm364 = vcmp.lt.s32.totalorder %v361, %v363
      %v365 = vsel %vm364, %v361, %v363
      %v366 = vand.u32 %v365, 65535
      %v367 = vshra.s32 %v365, 16
      %v368 = vcvt.s32.f32 %v366
      %v369 = vcvt.s32.f32 %v367
      %370 = vmin.xlane.f32.xlu0 %v369
      %v371 = vpop.xlane.xlu0 %370
      %vm372 = vcmp.eq.f32.partialorder %v369, %v371
      %v373 = vsel %vm372, %v368, inf
      %374 = vmin.xlane.f32.xlu0 %v373
      %v375 = vpop.xlane.xlu0 %374
      %v376 = vcvt.f32.s32 %v375
      %v377 = vcvt.f32.s32 %v371
      %v378 = vshll.u32 %v377, 16
      %v379 = vadd.s32 %v378, %v376
      %vm380 = vcmp.eq.s32.totalorder %v325, %v379
      %vm381 = vcmp.eq.s32.totalorder %v324, %v379
      %v382 = vsel %vm380, inf, %v353
      %v383 = vsel %vm381, inf, %v354
      %v384 = vsel %vm320, %v383, inf
      %v385 = vmin.f32 %v382, %v384
      %386 = vmin.xlane.f32.xlu0 %v385
      %v387 = vpop.xlane.xlu0 %386
      %vm388 = vcmp.le.f32.partialorder %v382, %v387
      %vm389 = vcmp.le.f32.partialorder %v383, %v387
      %v390 = vsel %vm388, %v325, 1073741824
      %v391 = vsel %vm389, %v324, 1073741824
      %v392 = vsel %vm320, %v391, 2147483647
      %vm393 = vcmp.lt.s32.totalorder %v390, %v392
      %v394 = vsel %vm393, %v390, %v392
      %v395 = vand.u32 %v394, 65535
      %v396 = vshra.s32 %v394, 16
      %v397 = vcvt.s32.f32 %v395
      %v398 = vcvt.s32.f32 %v396
      %399 = vmin.xlane.f32.xlu0 %v398
      %v400 = vpop.xlane.xlu0 %399
      %vm401 = vcmp.eq.f32.partialorder %v398, %v400
      %v402 = vsel %vm401, %v397, inf
      %403 = vmin.xlane.f32.xlu0 %v402
      %v404 = vpop.xlane.xlu0 %403
      %v405 = vcvt.f32.s32 %v404
      %v406 = vcvt.f32.s32 %v400
      %v407 = vshll.u32 %v406, 16
      %v408 = vadd.s32 %v407, %v405
      %vm409 = vcmp.eq.s32.totalorder %v325, %v408
      %vm410 = vcmp.eq.s32.totalorder %v324, %v408
      %v411 = vsel %vm409, inf, %v382
      %v412 = vsel %vm410, inf, %v383
      %v413 = vsel %vm320, %v412, inf
      %v414 = vmin.f32 %v411, %v413
      %415 = vmin.xlane.f32.xlu0 %v414
      %v416 = vpop.xlane.xlu0 %415
      %vm417 = vcmp.le.f32.partialorder %v411, %v416
      %vm418 = vcmp.le.f32.partialorder %v412, %v416
      %v419 = vsel %vm417, %v325, 1073741824
      %v420 = vsel %vm418, %v324, 1073741824
      %v421 = vsel %vm320, %v420, 2147483647
      %vm422 = vcmp.lt.s32.totalorder %v419, %v421
      %v423 = vsel %vm422, %v419, %v421
      %v424 = vand.u32 %v423, 65535
      %v425 = vshra.s32 %v423, 16
      %v426 = vcvt.s32.f32 %v424
      %v427 = vcvt.s32.f32 %v425
      %428 = vmin.xlane.f32.xlu0 %v427
      %v429 = vpop.xlane.xlu0 %428
      %vm430 = vcmp.eq.f32.partialorder %v427, %v429
      %v431 = vsel %vm430, %v426, inf
      %432 = vmin.xlane.f32.xlu0 %v431
      %v433 = vpop.xlane.xlu0 %432
      %v434 = vcvt.f32.s32 %v433
      %v435 = vcvt.f32.s32 %v429
      %v436 = vshll.u32 %v435, 16
      %v437 = vadd.s32 %v436, %v434
      %vm438 = vcmask 7168
      %v439 = vsel %vm438, %v329, %v358
      %vm440 = vcmask 15360
      %v441 = vsel %vm440, %v439, %v387
      %vm442 = vcmask 23552
      %v443 = vsel %vm442, %v441, %v416
      %v444 = vsel %vm438, %v350, %v379
      %v445 = vsel %vm440, %v444, %v408
      %v446 = vsel %vm442, %v445, %v437
      %447 = vst.msk [vmem:[#allocation2] sm:$0xff] %vm320, %v443
      %448 = vst.msk [vmem:[#allocation3] sm:$0xff] %vm320, %v446
      // Predicated region
      $region33: #{tpu_custom_call.1} parent=27 // pred_check
        %p449 = pneg %p251
      $region34: #{tpu_custom_call.1} parent=27 // pred_check_branch
        %451 = sbr.rel (%p449) target = $region36
      $region35: #{tpu_custom_call.1} parent=27 // pred_region
        %v452 = vmax.f32 %v443, 0.0
        %v453 = vrsqrt.pop %v452
        %v454 = vmul.f32 %v453, %v452
        %v455 = vmul.f32 %v454, %v453
        %v456 = vmul.f32 0.5, %v455
        %v457 = vsub.f32 1.5, %v456
        %v458 = vmul.f32 %v453, %v457
        %v459 = vmul.f32 %v452, %v458
        %vm460 = vcmp.eq.f32.partialorder %v452, inf
        %v461 = vsel %vm460, %v452, %v459
        %vm462 = vcmp.eq.f32.partialorder %v452, 0.0
        %v463 = vand.u32 %v452, 2147483648
        %v464 = vsel %vm462, %v463, %v461
        %465 = vst.msk [vmem:[%s250] sm:$0xff] %vm320, %v464
        %466 = vst.msk [vmem:[%s243] sm:$0xff] %vm320, %v446
      $region36: #{tpu_custom_call.1} parent=27 // pred_fallthru
        _
      %p467 = scmp.lt.s32.totalorder %s20, 1
      %s468 = scalar_select %p467, %s20, 1
      %p469 = scmp.lt.s32.totalorder %s21, 0
      %s470 = scalar_select %p469, %s21, 0
      %s471 = sadd.s32 %s470, %s468
      %s472 = smul.addr %s471, 8
      %s473 = scalar_lea.vmem %s2, %s472
      %p474 = scmp.lt.s32.totalorder %s20, 1
      %s475 = scalar_select %p474, %s20, 1
      %p476 = scmp.lt.s32.totalorder %s21, 0
      %s477 = scalar_select %p476, %s21, 0
      %s478 = sadd.s32 %s477, %s475
      %s479 = smul.addr %s478, 8
      %s480 = scalar_lea.vmem %s3, %s479
      // Predicated region
      $region37: #{tpu_custom_call.1} parent=27 // pred_check
        %p481 = pneg %p110
      $region38: #{tpu_custom_call.1} parent=27 // pred_check_branch
        %483 = sbr.rel (%p481) target = $region40
      $region39: #{tpu_custom_call.1} parent=27 // pred_region
        _
      $region40: #{tpu_custom_call.1} parent=27 // pred_fallthru
        _
      // Predicated region
      $region41: #{tpu_custom_call.1} parent=27 // pred_check
        %p484 = pneg %p138
      $region42: #{tpu_custom_call.1} parent=27 // pred_check_branch
        %486 = sbr.rel (%p484) target = $region44
      $region43: #{tpu_custom_call.1} parent=27 // pred_region
        _
      $region44: #{tpu_custom_call.1} parent=27 // pred_fallthru
        _
    $region28: #{tpu_custom_call.1} parent=5 // pred_fallthru
      _
    %p487 = scmp.le.s32.totalorder 2, %s10
    // Predicated region
    $region45: #{tpu_custom_call.1} parent=5 // pred_check
      %p488 = pneg %p487
    $region46: #{tpu_custom_call.1} parent=5 // pred_check_branch
      %490 = sbr.rel (%p488) target = $region48
    $region47: #{tpu_custom_call.1} parent=5 // pred_region
      %s491 = ssub.s32 %s10, 2
      // Predicated region
      $region49: #{tpu_custom_call.1} parent=47 // pred_check
        %p492 = pneg %p116
      $region50: #{tpu_custom_call.1} parent=47 // pred_check_branch
        %494 = sbr.rel (%p492) target = $region52
      $region51: #{tpu_custom_call.1} parent=47 // pred_region
        %p495 = scmp.lt.s32.totalorder %s23, 1
        %s496 = scalar_select %p495, %s23, 1
        %p497 = scmp.lt.s32.totalorder %s24, 0
        %s498 = scalar_select %p497, %s24, 0
        %s499 = sadd.s32 %s498, %s496
        %s500 = smul.addr %s499, 8
        %s501 = scalar_lea.vmem %s2, %s500
      $region52: #{tpu_custom_call.1} parent=47 // pred_fallthru
        _
      // Predicated region
      $region53: #{tpu_custom_call.1} parent=47 // pred_check
        %p502 = pneg %p144
      $region54: #{tpu_custom_call.1} parent=47 // pred_check_branch
        %504 = sbr.rel (%p502) target = $region56
      $region55: #{tpu_custom_call.1} parent=47 // pred_region
        %p505 = scmp.lt.s32.totalorder %s23, 1
        %s506 = scalar_select %p505, %s23, 1
        %p507 = scmp.lt.s32.totalorder %s24, 0
        %s508 = scalar_select %p507, %s24, 0
        %s509 = sadd.s32 %s508, %s506
        %s510 = smul.addr %s509, 8
        %s511 = scalar_lea.vmem %s3, %s510
      $region56: #{tpu_custom_call.1} parent=47 // pred_fallthru
        _
    $region48: #{tpu_custom_call.1} parent=5 // pred_fallthru
      _
  $region6: #{tpu_custom_call.1} parent=0 // loop_footer
    %s14 = sadd.s32 1, %s10
  $region7: #{tpu_custom_call.1} parent=0 // loop_footer_branch
    %9 = sbr.rel target = $region3
  $region8: #{tpu_custom_call.1} parent=0 // loop_exit
    _

</llo_original>
